<compile_context>
chip_gen: v5e
topology: v5e:2x2
jax: 0.10.0
libtpu: 0.0.40
codegen_flags: <defaults>
</compile_context>

<pallas_src>
import functools
import math

import jax
import jax.numpy as jnp
from jax.experimental import pallas as pl
from jax.experimental.pallas import tpu as pltpu


def _round_up(v, m):
    return pl.cdiv(v, m) * m


def _default_bf16_act():
    """Use bf16 tanh only where the EUP has a bf16 path (v6e / v7x)."""
    try:
        kind = jax.devices()[0].device_kind.lower()
    except Exception:
        return False
    return not any(g in kind for g in ("v2", "v3", "v4", "v5"))


def _disc_kernel(x_ref, w1_ref, w2_ref, bias_ref, wl_ref, bl_ref, out_ref, *, act_dtype):
    """One batch tile.  x tile is (tile_b, in_dim); batch ends up on lanes."""
    mm = w1_ref.dtype
    x = x_ref[...].astype(mm)                                    # (tile_b, in_dim)

    # ---- net layer 1: contract the feature axis of BOTH operands, so the
    #      result is (h_pad, tile_b) with batch on the lane axis (MXU, f32 acc).
    h = jax.lax.dot_general(w1_ref[...], x, (((1,), (1,)), ((), ())),
                            preferred_element_type=jnp.float32)  # (h_pad, tile_b)
    h = jnp.tanh((h + bias_ref[:, 0:1]).astype(act_dtype))

    # ---- net layer 2 ----
    h = jnp.dot(w2_ref[...], h.astype(mm), preferred_element_type=jnp.float32)
    h = jnp.tanh((h + bias_ref[:, 1:2]).astype(act_dtype))       # (h_pad, tile_b)

    # ---- logic: Linear(H, 1) as an MXU matvec (row 0 of wl is real) ----
    logit = jnp.dot(wl_ref[...], h.astype(mm),
                    preferred_element_type=jnp.float32)          # (8, tile_b)
    out_ref[...] = jax.nn.sigmoid(logit[0:1, :] + bl_ref[0, 0]).astype(out_ref.dtype)


def discriminator_forward(x, params, *, tile_b=1024, use_bf16=True, bf16_act=None):
    """x: (B, in_dim) f32.  params hold PyTorch-layout weights (out, in)."""
    B, in_dim = x.shape
    W1, b1 = params["W1"], params["b1"]             # (H, in), (H,)
    W2, b2 = params["W2"], params["b2"]             # (H, H),  (H,)
    Wl, bl = params["W_logic"], params["b_logic"]   # (1, H),  (1,)
    H = W1.shape[0]

    if bf16_act is None:
        bf16_act = use_bf16 and _default_bf16_act()
    mm_dtype = jnp.bfloat16 if use_bf16 else jnp.float32
    act_dtype = jnp.bfloat16 if (use_bf16 and bf16_act) else jnp.float32

    # Clamp the batch tile to the (128-rounded) batch so tiny batches don't
    # burn a huge mostly-padding tile; keep it a lane multiple.
    tile_b = max(128, min(tile_b, _round_up(B, 128)))
    assert tile_b % 128 == 0
    n_tiles = pl.cdiv(B, tile_b)          # partial last tile handled by Pallas
    h_pad = _round_up(H, 128)

    # One-time weight prep (tiny, resident).  Zero padding of the hidden dim is
    # numerically exact: padded rows give tanh(0)=0 and meet zero logic weights.
    W1p = jnp.pad(W1, ((0, h_pad - H), (0, 0))).astype(mm_dtype)          # (h_pad, in)
    W2p = jnp.pad(W2, ((0, h_pad - H), (0, h_pad - H))).astype(mm_dtype)  # (h_pad, h_pad)
    biasp = jnp.stack([jnp.pad(b1, (0, h_pad - H)),
                       jnp.pad(b2, (0, h_pad - H))], axis=1).astype(jnp.float32)  # (h_pad, 2)
    wlp = jnp.zeros((8, h_pad), mm_dtype).at[0, :H].set(Wl[0].astype(mm_dtype))   # (8, h_pad)
    blp = bl.reshape(1, 1).astype(jnp.float32)

    # VMEM budget: streamed x / out tiles are double-buffered, the resident
    # weights are also double-buffered, and the f32 (h_pad, tile_b)
    # intermediates are compiler scratch that grows linearly with tile_b.
    itm = jnp.dtype(mm_dtype).itemsize
    in_lane = _round_up(in_dim, 128)
    x_bytes = tile_b * in_lane * 4
    out_bytes = 8 * tile_b * 4
    w_bytes = (h_pad * in_lane * itm + h_pad * h_pad * itm
               + h_pad * 128 * 4 + 8 * h_pad * itm)
    interm_bytes = 3 * h_pad * tile_b * 4
    est = 2 * (x_bytes + out_bytes) + 2 * w_bytes + interm_bytes

    cp_kwargs = {}
    if est > (16 << 20):
        try:
            vmem_cap = int(pltpu.get_tpu_info().vmem_capacity_bytes)
        except Exception:
            vmem_cap = 64 << 20                       # conservative (v7x-sized)
        cp_kwargs["vmem_limit_bytes"] = min(int(est * 1.25) + (8 << 20),
                                            int(vmem_cap * 0.85))

    kernel = functools.partial(_disc_kernel, act_dtype=act_dtype)
    out = pl.pallas_call(
        kernel,
        out_shape=jax.ShapeDtypeStruct((1, B), jnp.float32),
        grid_spec=pltpu.PrefetchScalarGridSpec(
            num_scalar_prefetch=0,
            grid=(n_tiles,),                          # prefer even depth on v7x
            in_specs=[
                pl.BlockSpec((tile_b, in_dim), lambda i: (i, 0)),   # x, native layout
                pl.BlockSpec((h_pad, in_dim), lambda i: (0, 0)),    # W1
                pl.BlockSpec((h_pad, h_pad), lambda i: (0, 0)),     # W2
                pl.BlockSpec((h_pad, 2), lambda i: (0, 0)),         # [b1 | b2]
                pl.BlockSpec((8, h_pad), lambda i: (0, 0)),         # w_logic (row 0)
                pl.BlockSpec(memory_space=pltpu.MemorySpace.SMEM),  # b_logic scalar
            ],
            out_specs=pl.BlockSpec((1, tile_b), lambda i: (0, i)),  # lane-dense row
        ),
        compiler_params=pltpu.CompilerParams(
            dimension_semantics=("parallel",), **cp_kwargs),
    )(x, W1p, W2p, biasp, wlp, blp)

    return out.reshape(B, 1)


def init_params(key, in_dim, hidden):
    """nn.Linear-style init in PyTorch (out, in) layout + the Discriminator
    __init__ post-processing (logic.weight *= 0.1, logic.bias *= 0.0)."""
    ks = jax.random.split(key, 6)

    def linear(kw, kb, fan_in, fan_out):
        bound = 1.0 / math.sqrt(fan_in)
        w = jax.random.uniform(kw, (fan_out, fan_in), jnp.float32, -bound, bound)
        b = jax.random.uniform(kb, (fan_out,), jnp.float32, -bound, bound)
        return w, b

    W1, b1 = linear(ks[0], ks[1], in_dim, hidden)
    W2, b2 = linear(ks[2], ks[3], hidden, hidden)
    Wl, bl = linear(ks[4], ks[5], hidden, 1)
    Wl = Wl * 0.1
    bl = bl * 0.0
    return {"W1": W1, "b1": b1, "W2": W2, "b2": b2, "W_logic": Wl, "b_logic": bl}


def reference_forward(x, params, *, use_bf16=True, bf16_act=None):
    """Pure-JAX reference mirroring the kernel's precision policy."""
    if bf16_act is None:
        bf16_act = use_bf16 and _default_bf16_act()
    mm = jnp.bfloat16 if use_bf16 else jnp.float32
    act = jnp.bfloat16 if (use_bf16 and bf16_act) else jnp.float32

    def lin(a, w, b):
        return jnp.dot(a.astype(mm), w.T.astype(mm),
                       preferred_element_type=jnp.float32) + b[None, :]

    h = jnp.tanh(lin(x, params["W1"], params["b1"]).astype(act))
    h = jnp.tanh(lin(h, params["W2"], params["b2"]).astype(act))
    logit = lin(h, params["W_logic"], params["b_logic"])   # f32, like the kernel
    return jax.nn.sigmoid(logit)


if __name__ == "__main__":
    # Deliberately non-aligned small shapes: batch 500 -> two 256-wide tiles
    # (one partial), features 69 / hidden 100 stay unpadded on the streamed side.
    B, IN_DIM, HIDDEN = 500, 69, 100

    key = jax.random.PRNGKey(0)
    kx, kp = jax.random.split(key)
    x = jax.random.normal(kx, (B, IN_DIM), jnp.float32)
    params = init_params(kp, IN_DIM, HIDDEN)

    bf16_act = _default_bf16_act()
    prob = discriminator_forward(x, params, tile_b=256, use_bf16=True, bf16_act=bf16_act)
    prob = jax.block_until_ready(prob)

    ref = reference_forward(x, params, use_bf16=True, bf16_act=bf16_act)
    assert prob.shape == (B, 1)
    max_err = float(jnp.max(jnp.abs(prob - ref)))
    assert jnp.allclose(prob, ref, atol=2e-3, rtol=2e-3), f"max abs err {max_err}"
    print("KERNEL_OK")
</pallas_src>

<mosaic_0001>
module attributes {stable_mosaic.version = 11 : i64} {
  func.func @_disc_kernel(%arg0: i32, %arg1: memref<256x69xf32, #tpu.memory_space<vmem>>, %arg2: memref<128x69xbf16, #tpu.memory_space<vmem>>, %arg3: memref<128x128xbf16, #tpu.memory_space<vmem>>, %arg4: memref<128x2xf32, #tpu.memory_space<vmem>>, %arg5: memref<8x128xbf16, #tpu.memory_space<vmem>>, %arg6: memref<1x1xf32, #tpu.memory_space<smem>>, %arg7: memref<1x256xf32, #tpu.memory_space<vmem>>) attributes {dimension_semantics = [#tpu.dimension_semantics<parallel>], iteration_bounds = array<i64: 2>, scalar_prefetch = 0 : i64, scratch_operands = 0 : i64, tpu.core_type = #tpu.core_type<tc>, window_params = [{transform_indices = @transform_0, window_bounds = array<i64: 256, 69>}, {pipeline_mode = #tpu.pipeline_mode<synchronous>, transform_indices = @transform_1, window_bounds = array<i64: 128, 69>}, {pipeline_mode = #tpu.pipeline_mode<synchronous>, transform_indices = @transform_2, window_bounds = array<i64: 128, 128>}, {pipeline_mode = #tpu.pipeline_mode<synchronous>, transform_indices = @transform_3, window_bounds = array<i64: 128, 2>}, {pipeline_mode = #tpu.pipeline_mode<synchronous>, transform_indices = @transform_4, window_bounds = array<i64: 8, 128>}, {transform_indices = @transform_5, window_bounds = array<i64: 1, 1>}, {transform_indices = @transform_6, window_bounds = array<i64: 1, 256>}]} {
    %c0 = arith.constant 0 : index
    %c0_0 = arith.constant 0 : index
    %0 = vector.load %arg1[%c0, %c0_0] : memref<256x69xf32, #tpu.memory_space<vmem>>, vector<256x69xf32>
    %1 = arith.truncf %0 : vector<256x69xf32> to vector<256x69xbf16>
    %c0_1 = arith.constant 0 : index
    %c0_2 = arith.constant 0 : index
    %2 = vector.load %arg2[%c0_1, %c0_2] : memref<128x69xbf16, #tpu.memory_space<vmem>>, vector<128x69xbf16>
    %cst = arith.constant dense<0.000000e+00> : vector<128x256xf32>
    %3 = tpu.matmul %2, %1, %cst {dimension_numbers = #tpu.dot_dimension_numbers<[1], [1], [0], [0], [0, 0, 1, 0], [], []>} : vector<128x69xbf16>, vector<256x69xbf16>, vector<128x256xf32> -> vector<128x256xf32>
    %c0_3 = arith.constant 0 : index
    %c0_4 = arith.constant 0 : index
    %4 = vector.load %arg4[%c0_3, %c0_4] : memref<128x2xf32, #tpu.memory_space<vmem>>, vector<128x1xf32>
    %5 = vector.broadcast %4 : vector<128x1xf32> to vector<128x256xf32>
    %6 = arith.addf %3, %5 : vector<128x256xf32>
    %7 = arith.truncf %6 : vector<128x256xf32> to vector<128x256xbf16>
    %8 = math.tanh %7 : vector<128x256xbf16>
    %c0_5 = arith.constant 0 : index
    %c0_6 = arith.constant 0 : index
    %9 = vector.load %arg3[%c0_5, %c0_6] : memref<128x128xbf16, #tpu.memory_space<vmem>>, vector<128x128xbf16>
    %cst_7 = arith.constant dense<0.000000e+00> : vector<128x256xf32>
    %10 = tpu.matmul %9, %8, %cst_7 {dimension_numbers = #tpu.dot_dimension_numbers<[1], [0], [0], [1], [0, 0, 1, 1], [], []>} : vector<128x128xbf16>, vector<128x256xbf16>, vector<128x256xf32> -> vector<128x256xf32>
    %c0_8 = arith.constant 0 : index
    %c1 = arith.constant 1 : index
    %11 = vector.load %arg4[%c0_8, %c1] : memref<128x2xf32, #tpu.memory_space<vmem>>, vector<128x1xf32>
    %12 = vector.broadcast %11 : vector<128x1xf32> to vector<128x256xf32>
    %13 = arith.addf %10, %12 : vector<128x256xf32>
    %14 = arith.truncf %13 : vector<128x256xf32> to vector<128x256xbf16>
    %15 = math.tanh %14 : vector<128x256xbf16>
    %c0_9 = arith.constant 0 : index
    %c0_10 = arith.constant 0 : index
    %16 = vector.load %arg5[%c0_9, %c0_10] : memref<8x128xbf16, #tpu.memory_space<vmem>>, vector<8x128xbf16>
    %cst_11 = arith.constant dense<0.000000e+00> : vector<8x256xf32>
    %17 = tpu.matmul %16, %15, %cst_11 {dimension_numbers = #tpu.dot_dimension_numbers<[1], [0], [0], [1], [0, 0, 1, 1], [], []>} : vector<8x128xbf16>, vector<128x256xbf16>, vector<8x256xf32> -> vector<8x256xf32>
    %18 = vector.extract_strided_slice %17 {offsets = [0, 0], sizes = [1, 256], strides = [1, 1]} : vector<8x256xf32> to vector<1x256xf32>
    %c0_12 = arith.constant 0 : index
    %c0_13 = arith.constant 0 : index
    %19 = memref.load %arg6[%c0_12, %c0_13] : memref<1x1xf32, #tpu.memory_space<smem>>
    %20 = vector.broadcast %19 : f32 to vector<1x256xf32>
    %21 = arith.addf %18, %20 : vector<1x256xf32>
    %22 = arith.negf %21 : vector<1x256xf32>
    %23 = math.exp %22 : vector<1x256xf32>
    %cst_14 = arith.constant 1.000000e+00 : f32
    %24 = vector.broadcast %cst_14 : f32 to vector<1x256xf32>
    %25 = arith.addf %24, %23 : vector<1x256xf32>
    %26 = arith.divf %24, %25 : vector<1x256xf32>
    %c0_15 = arith.constant 0 : index
    %c0_16 = arith.constant 0 : index
    %27 = vector.load %arg7[%c0_15, %c0_16] : memref<1x256xf32, #tpu.memory_space<vmem>>, vector<1x256xf32>
    tpu.vector_store %arg7[%c0_15, %c0_16], %26 {strides = array<i32>} : memref<1x256xf32, #tpu.memory_space<vmem>>, vector<1x256xf32>,
    return
  }
  func.func @transform_0(%arg0: i32) -> (i32, i32) {
    %c0_i32 = arith.constant 0 : i32
    %c0_i32_0 = arith.constant 0 : i32
    return %arg0, %c0_i32 : i32, i32
  }
  func.func @transform_1(%arg0: i32) -> (i32, i32) {
    %c0_i32 = arith.constant 0 : i32
    %c0_i32_0 = arith.constant 0 : i32
    %c0_i32_1 = arith.constant 0 : i32
    return %c0_i32, %c0_i32_0 : i32, i32
  }
  func.func @transform_2(%arg0: i32) -> (i32, i32) {
    %c0_i32 = arith.constant 0 : i32
    %c0_i32_0 = arith.constant 0 : i32
    %c0_i32_1 = arith.constant 0 : i32
    return %c0_i32, %c0_i32_0 : i32, i32
  }
  func.func @transform_3(%arg0: i32) -> (i32, i32) {
    %c0_i32 = arith.constant 0 : i32
    %c0_i32_0 = arith.constant 0 : i32
    %c0_i32_1 = arith.constant 0 : i32
    return %c0_i32, %c0_i32_0 : i32, i32
  }
  func.func @transform_4(%arg0: i32) -> (i32, i32) {
    %c0_i32 = arith.constant 0 : i32
    %c0_i32_0 = arith.constant 0 : i32
    %c0_i32_1 = arith.constant 0 : i32
    return %c0_i32, %c0_i32_0 : i32, i32
  }
  func.func @transform_5(%arg0: i32) -> (i32, i32) {
    %c0_i32 = arith.constant 0 : i32
    %c0_i32_0 = arith.constant 0 : i32
    %c0_i32_1 = arith.constant 0 : i32
    return %c0_i32, %c0_i32_0 : i32, i32
  }
  func.func @transform_6(%arg0: i32) -> (i32, i32) {
    %c0_i32 = arith.constant 0 : i32
    %c0_i32_0 = arith.constant 0 : i32
    return %c0_i32, %arg0 : i32, i32
  }
}

</mosaic_0001>

<llo_original>
// kernel: tpu_custom_call.1
$region0: #{tpu_custom_call.1}
  #allocation0 [shape = 'u32[]', space=smem, size = 0x4, offset = 0x4, fixed_abs, tag = 'smem constant byte address 0x4 - core index']
  #allocation1 [shape = 'u32[72,128]{1,0:T(1,128)}', space=vmem, size = 0x9000, scoped, tag = 'internal scratch']
  #allocation2 [shape = 'f32[1,1]{1,0:T(1,128)S(6)}', space=smem, size = 0x200, scoped, tag = 'scoped memory for tpu_custom_call.1']
  %s0 = inlined_call_operand.vmem [shape: f32[500,69], index: 0, kind: input, shape index: {}]
  %s1 = inlined_call_operand.vmem [shape: bf16[128,69], index: 1, kind: input, shape index: {}]
  %s2 = inlined_call_operand.vmem [shape: bf16[128,128], index: 2, kind: input, shape index: {}]
  %s3 = inlined_call_operand.vmem [shape: f32[128,2], index: 3, kind: input, shape index: {}]
  %s4 = inlined_call_operand.vmem [shape: bf16[8,128], index: 4, kind: input, shape index: {}]
  %s5 = inlined_call_operand.<no memory space> [shape: f32[1,1], index: 5, kind: input, shape index: {}]
  %s6 = inlined_call_operand.hbm [shape: f32[1,500], index: 6, kind: output, shape index: {}]
  %s7 = sld [smem:[#allocation0]]
  $region57: #{tpu_custom_call.1} parent=0
    _
  %s9 = ssub.s32 1, %s7
  %s10 = scalar_select 0, %s9, %s7
  %11 = sst [smem:[#allocation2]] %s5
  $region1: #{tpu_custom_call.1} parent=0
    #allocation3 [shape = 'u8[2048]{0}', space=vmem, size = 0x800, scoped, tag = 'output window, operand 0']
    #allocation4 [shape = 's32[2]{0}', space=sflag, size = 0x8, scoped, tag = 'scoped memory for tpu_custom_call.1']
    %12 = vsyncpa [#allocation4], 0
    %s13 = scalar_lea.sflag [#allocation4], 1
    %14 = vsyncpa %s13, 0
    loop: start=0, step=1, limit=4
    $region2: #{tpu_custom_call.1} parent=1 // loop_pre_header
      _
    $region3: #{tpu_custom_call.1} parent=1 // loop_header
      %s16 = sphi 0, %s20
      %p17 = scmp.ge.s32.totalorder %s16, 4
      %s26 = sphi 0, %s28
      %s29 = sphi 0, %s26
      %s30 = sphi 0, %s29
      %s46 = sphi 0, %s30
      %s50 = sphi 0, %s50
      %s52 = sphi 0, %s50
      %s53 = sphi 0, %s52
      %s67 = sphi 0, %s53
      %s71 = sphi 0, %s71
      %s73 = sphi 0, %s71
      %s74 = sphi 0, %s73
      %s88 = sphi 0, %s74
      %s92 = sphi 0, %s92
      %s94 = sphi 0, %s92
      %s95 = sphi 0, %s94
      %s109 = sphi 0, %s95
      %s113 = sphi 0, %s113
      %s115 = sphi 0, %s113
      %s116 = sphi 0, %s115
      %s130 = sphi 0, %s116
      %s134 = sphi 0, %s134
      %s136 = sphi 0, %s134
      %s137 = sphi 0, %s136
      %s151 = sphi 0, %s137
      %s157 = sphi 0, %s159
      %s160 = sphi 0, %s157
      %s161 = sphi 0, %s160
      %s177 = sphi 0, %s161
    $region4: #{tpu_custom_call.1} parent=1 // loop_header_branch
      %19 = sbr.rel (%p17) target = $region8
    $region5: #{tpu_custom_call.1} parent=1 // loop_body
      %s21 = ssub.s32 %s16, 1
      %s22 = ssub.s32 %s16, 2
      %s23 = sadd.s32 %s16, 1
      %s24 = ssub.s32 %s16, %s23
      %p25 = scmp.eq.s32.totalorder %s24, 0
      %s27 = sadd.s32 %s26, 1
      %s28 = scalar_select %p25, %s26, %s27
      %p31 = pneg %p25
      %p32 = scmp.eq.s32.totalorder %s16, 1
      %p33 = por %p31, %p32
      %p34 = scmp.ne.s32.totalorder %s26, %s29
      %p35 = scmp.eq.s32.totalorder %s16, 0
      %p36 = por %p34, %p35
      %p37 = scmp.ne.s32.totalorder %s26, %s29
      %p38 = scmp.eq.s32.totalorder %s21, 1
      %p39 = por %p37, %p38
      %p40 = scmp.ne.s32.totalorder %s29, %s30
      %p41 = scmp.eq.s32.totalorder %s21, 0
      %p42 = por %p40, %p41
      %p43 = scmp.ne.s32.totalorder %s29, %s30
      %p44 = scmp.eq.s32.totalorder %s22, 1
      %p45 = por %p43, %p44
      %p47 = scmp.ne.s32.totalorder %s30, %s46
      %p48 = scmp.eq.s32.totalorder %s22, 0
      %p49 = por %p47, %p48
      %s51 = sadd.s32 %s50, 1
      %p54 = scmp.eq.s32.totalorder %s16, 1
      %p55 = scmp.ne.s32.totalorder %s50, %s52
      %p56 = scmp.eq.s32.totalorder %s16, 0
      %p57 = por %p55, %p56
      %p58 = scmp.ne.s32.totalorder %s50, %s52
      %p59 = scmp.eq.s32.totalorder %s21, 1
      %p60 = por %p58, %p59
      %p61 = scmp.ne.s32.totalorder %s52, %s53
      %p62 = scmp.eq.s32.totalorder %s21, 0
      %p63 = por %p61, %p62
      %p64 = scmp.ne.s32.totalorder %s52, %s53
      %p65 = scmp.eq.s32.totalorder %s22, 1
      %p66 = por %p64, %p65
      %p68 = scmp.ne.s32.totalorder %s53, %s67
      %p69 = scmp.eq.s32.totalorder %s22, 0
      %p70 = por %p68, %p69
      %s72 = sadd.s32 %s71, 1
      %p75 = scmp.eq.s32.totalorder %s16, 1
      %p76 = scmp.ne.s32.totalorder %s71, %s73
      %p77 = scmp.eq.s32.totalorder %s16, 0
      %p78 = por %p76, %p77
      %p79 = scmp.ne.s32.totalorder %s71, %s73
      %p80 = scmp.eq.s32.totalorder %s21, 1
      %p81 = por %p79, %p80
      %p82 = scmp.ne.s32.totalorder %s73, %s74
      %p83 = scmp.eq.s32.totalorder %s21, 0
      %p84 = por %p82, %p83
      %p85 = scmp.ne.s32.totalorder %s73, %s74
      %p86 = scmp.eq.s32.totalorder %s22, 1
      %p87 = por %p85, %p86
      %p89 = scmp.ne.s32.totalorder %s74, %s88
      %p90 = scmp.eq.s32.totalorder %s22, 0
      %p91 = por %p89, %p90
      %s93 = sadd.s32 %s92, 1
      %p96 = scmp.eq.s32.totalorder %s16, 1
      %p97 = scmp.ne.s32.totalorder %s92, %s94
      %p98 = scmp.eq.s32.totalorder %s16, 0
      %p99 = por %p97, %p98
      %p100 = scmp.ne.s32.totalorder %s92, %s94
      %p101 = scmp.eq.s32.totalorder %s21, 1
      %p102 = por %p100, %p101
      %p103 = scmp.ne.s32.totalorder %s94, %s95
      %p104 = scmp.eq.s32.totalorder %s21, 0
      %p105 = por %p103, %p104
      %p106 = scmp.ne.s32.totalorder %s94, %s95
      %p107 = scmp.eq.s32.totalorder %s22, 1
      %p108 = por %p106, %p107
      %p110 = scmp.ne.s32.totalorder %s95, %s109
      %p111 = scmp.eq.s32.totalorder %s22, 0
      %p112 = por %p110, %p111
      %s114 = sadd.s32 %s113, 1
      %p117 = scmp.eq.s32.totalorder %s16, 1
      %p118 = scmp.ne.s32.totalorder %s113, %s115
      %p119 = scmp.eq.s32.totalorder %s16, 0
      %p120 = por %p118, %p119
      %p121 = scmp.ne.s32.totalorder %s113, %s115
      %p122 = scmp.eq.s32.totalorder %s21, 1
      %p123 = por %p121, %p122
      %p124 = scmp.ne.s32.totalorder %s115, %s116
      %p125 = scmp.eq.s32.totalorder %s21, 0
      %p126 = por %p124, %p125
      %p127 = scmp.ne.s32.totalorder %s115, %s116
      %p128 = scmp.eq.s32.totalorder %s22, 1
      %p129 = por %p127, %p128
      %p131 = scmp.ne.s32.totalorder %s116, %s130
      %p132 = scmp.eq.s32.totalorder %s22, 0
      %p133 = por %p131, %p132
      %s135 = sadd.s32 %s134, 1
      %p138 = scmp.eq.s32.totalorder %s16, 1
      %p139 = scmp.ne.s32.totalorder %s134, %s136
      %p140 = scmp.eq.s32.totalorder %s16, 0
      %p141 = por %p139, %p140
      %p142 = scmp.ne.s32.totalorder %s134, %s136
      %p143 = scmp.eq.s32.totalorder %s21, 1
      %p144 = por %p142, %p143
      %p145 = scmp.ne.s32.totalorder %s136, %s137
      %p146 = scmp.eq.s32.totalorder %s21, 0
      %p147 = por %p145, %p146
      %p148 = scmp.ne.s32.totalorder %s136, %s137
      %p149 = scmp.eq.s32.totalorder %s22, 1
      %p150 = por %p148, %p149
      %p152 = scmp.ne.s32.totalorder %s137, %s151
      %p153 = scmp.eq.s32.totalorder %s22, 0
      %p154 = por %p152, %p153
      %s155 = ssub.s32 %s16, %s23
      %p156 = scmp.eq.s32.totalorder %s155, 0
      %s158 = sadd.s32 %s157, 1
      %s159 = scalar_select %p156, %s157, %s158
      %p162 = pneg %p156
      %p163 = scmp.eq.s32.totalorder %s16, 1
      %p164 = por %p162, %p163
      %p165 = scmp.ne.s32.totalorder %s157, %s160
      %p166 = scmp.eq.s32.totalorder %s16, 0
      %p167 = por %p165, %p166
      %p168 = scmp.ne.s32.totalorder %s157, %s160
      %p169 = scmp.eq.s32.totalorder %s21, 1
      %p170 = por %p168, %p169
      %p171 = scmp.ne.s32.totalorder %s160, %s161
      %p172 = scmp.eq.s32.totalorder %s21, 0
      %p173 = por %p171, %p172
      %p174 = scmp.ne.s32.totalorder %s160, %s161
      %p175 = scmp.eq.s32.totalorder %s22, 1
      %p176 = por %p174, %p175
      %p178 = scmp.ne.s32.totalorder %s161, %s177
      %p179 = scmp.eq.s32.totalorder %s22, 0
      %p180 = por %p178, %p179
      %p181 = scmp.le.s32.totalorder 1, %s16
      %p182 = scmp.lt.s32.totalorder %s16, 3
      %p183 = pnand %p181, %p182
      %p184 = pneg %p183
      // Predicated region
      $region9: #{tpu_custom_call.1} parent=5 // pred_check
        _
      $region10: #{tpu_custom_call.1} parent=5 // pred_check_branch
        %186 = sbr.rel (%p183) target = $region12
      $region11: #{tpu_custom_call.1} parent=5 // pred_region
        %s187 = ssub.s32 %s16, 1
        // Predicated region
        $region13: #{tpu_custom_call.1} parent=11 // pred_check
          %p188 = pneg %p63
        $region14: #{tpu_custom_call.1} parent=11 // pred_check_branch
          %190 = sbr.rel (%p188) target = $region16
        $region15: #{tpu_custom_call.1} parent=11 // pred_region
          _
        $region16: #{tpu_custom_call.1} parent=11 // pred_fallthru
          _
        // Predicated region
        $region17: #{tpu_custom_call.1} parent=11 // pred_check
          %p191 = pneg %p84
        $region18: #{tpu_custom_call.1} parent=11 // pred_check_branch
          %193 = sbr.rel (%p191) target = $region20
        $region19: #{tpu_custom_call.1} parent=11 // pred_region
          _
        $region20: #{tpu_custom_call.1} parent=11 // pred_fallthru
          _
        // Predicated region
        $region21: #{tpu_custom_call.1} parent=11 // pred_check
          %p194 = pneg %p105
        $region22: #{tpu_custom_call.1} parent=11 // pred_check_branch
          %196 = sbr.rel (%p194) target = $region24
        $region23: #{tpu_custom_call.1} parent=11 // pred_region
          _
        $region24: #{tpu_custom_call.1} parent=11 // pred_fallthru
          _
        // Predicated region
        $region25: #{tpu_custom_call.1} parent=11 // pred_check
          %p197 = pneg %p126
        $region26: #{tpu_custom_call.1} parent=11 // pred_check_branch
          %199 = sbr.rel (%p197) target = $region28
        $region27: #{tpu_custom_call.1} parent=11 // pred_region
          _
        $region28: #{tpu_custom_call.1} parent=11 // pred_fallthru
          _
        // Predicated region
        $region29: #{tpu_custom_call.1} parent=11 // pred_check
          %p200 = pneg %p147
        $region30: #{tpu_custom_call.1} parent=11 // pred_check_branch
          %202 = sbr.rel (%p200) target = $region32
        $region31: #{tpu_custom_call.1} parent=11 // pred_region
          _
        $region32: #{tpu_custom_call.1} parent=11 // pred_fallthru
          _
      $region12: #{tpu_custom_call.1} parent=5 // pred_fallthru
        _
      %p203 = scmp.lt.s32.totalorder %s16, 2
      // Predicated region
      $region33: #{tpu_custom_call.1} parent=5 // pred_check
        %p204 = pneg %p203
      $region34: #{tpu_custom_call.1} parent=5 // pred_check_branch
        %206 = sbr.rel (%p204) target = $region36
      $region35: #{tpu_custom_call.1} parent=5 // pred_region
        // Predicated region
        $region37: #{tpu_custom_call.1} parent=35 // pred_check
          %p207 = pneg %p36
        $region38: #{tpu_custom_call.1} parent=35 // pred_check_branch
          %209 = sbr.rel (%p207) target = $region40
        $region39: #{tpu_custom_call.1} parent=35 // pred_region
          %s210 = smul.u32 32, %s16
          %s211 = ssub.s32 63, %s210
          %p212 = scmp.lt.s32.totalorder %s211, 32
          %s213 = scalar_select %p212, %s211, 32
          %s214 = smul.u32 8, %s213
          %p215 = scmp.lt.s32.totalorder %s210, 62
          %s216 = scalar_select %p215, %s210, 62
          %s217 = smul.addr %s216, 8
          %s218 = scalar_lea.vmem %s0, %s217
          %s219 = smul.u32 32, %s16
          %s220 = ssub.s32 63, %s219
          %p221 = scmp.lt.s32.totalorder %s220, 32
          %s222 = scalar_select %p221, %s220, 32
          %s223 = smul.u32 8, %s222
        $region40: #{tpu_custom_call.1} parent=35 // pred_fallthru
          _
      $region36: #{tpu_custom_call.1} parent=5 // pred_fallthru
        _
      %p224 = scmp.le.s32.totalorder 1, %s16
      %p225 = scmp.lt.s32.totalorder %s16, 3
      %p226 = pnand %p224, %p225
      %p227 = pneg %p226
      // Predicated region
      $region41: #{tpu_custom_call.1} parent=5 // pred_check
        _
      $region42: #{tpu_custom_call.1} parent=5 // pred_check_branch
        %229 = sbr.rel (%p226) target = $region44
      $region43: #{tpu_custom_call.1} parent=5 // pred_region
        %s230 = ssub.s32 %s16, 1
        %s231 = smul.u32 32, %s21
        %s232 = ssub.s32 63, %s231
        %p233 = scmp.lt.s32.totalorder %s232, 32
        %s234 = scalar_select %p233, %s232, 32
        %s235 = smul.u32 8, %s234
        %p236 = scmp.lt.s32.totalorder %s231, 62
        %s237 = scalar_select %p236, %s231, 62
        %s238 = smul.addr %s237, 8
        %s239 = scalar_lea.vmem %s0, %s238
        %p240 = pneg %p42
        %p241 = pneg %p39
        %p242 = pneg %p63
        %p243 = pneg %p60
        %p244 = pneg %p84
        %p245 = pneg %p81
        %p246 = pneg %p105
        %p247 = pneg %p102
        %p248 = pneg %p126
        %p249 = pneg %p123
        %p250 = pneg %p147
        %p251 = pneg %p144
        %p252 = pneg %p173
        %p253 = pneg %p170
        %s254 = sand.u32 %s160, 1
        %s255 = scalar_lea.sflag [#allocation4], %s254
        %s256 = sand.u32 %s160, 1
        %s257 = smul.addr %s256, 2
        %s258 = scalar_lea.vmem [#allocation3], %s257
        %s259 = smul.u32 32, %s21
        %s260 = ssub.s32 63, %s259
        %p261 = scmp.lt.s32.totalorder %s260, 32
        %s262 = scalar_select %p261, %s260, 32
        %s263 = smul.u32 8, %s262
        %p264 = scmp.lt.s32.totalorder %s259, 62
        %s265 = scalar_select %p264, %s259, 62
        %s266 = smul.addr %s265, 8
        %s267 = scalar_lea.vmem %s0, %s266
        %s268 = smul.u32 32, %s21
        %s269 = ssub.s32 63, %s268
        %p270 = scmp.lt.s32.totalorder %s269, 32
        %s271 = scalar_select %p270, %s269, 32
        %s272 = smul.u32 8, %s271
        %s273 = smul.u32 2, %s21
        %v274 = vld [vmem:[%s267] sm:$0xff]
        %v275 = vld [vmem:[%s267 + $0x8] sm:$0xff]
        %v276 = vld [vmem:[%s267 + $0x10] sm:$0xff]
        %v277 = vld [vmem:[%s267 + $0x18] sm:$0xff]
        %v278 = vld [vmem:[%s267 + $0x20] sm:$0xff]
        %v279 = vld [vmem:[%s267 + $0x28] sm:$0xff]
        %v280 = vld [vmem:[%s267 + $0x30] sm:$0xff]
        %v281 = vld [vmem:[%s267 + $0x38] sm:$0xff]
        %v282 = vld [vmem:[%s267 + $0x40] sm:$0xff]
        %v283 = vld [vmem:[%s267 + $0x48] sm:$0xff]
        %v284 = vld [vmem:[%s267 + $0x50] sm:$0xff]
        %v285 = vld [vmem:[%s267 + $0x58] sm:$0xff]
        %v286 = vld [vmem:[%s267 + $0x60] sm:$0xff]
        %v287 = vld [vmem:[%s267 + $0x68] sm:$0xff]
        %v288 = vld [vmem:[%s267 + $0x70] sm:$0xff]
        %v289 = vld [vmem:[%s267 + $0x78] sm:$0xff]
        %v290 = vld [vmem:[%s267 + $0x80] sm:$0xff]
        %v291 = vld [vmem:[%s267 + $0x88] sm:$0xff]
        %v292 = vld [vmem:[%s267 + $0x90] sm:$0xff]
        %v293 = vld [vmem:[%s267 + $0x98] sm:$0xff]
        %v294 = vld [vmem:[%s267 + $0xa0] sm:$0xff]
        %v295 = vld [vmem:[%s267 + $0xa8] sm:$0xff]
        %v296 = vld [vmem:[%s267 + $0xb0] sm:$0xff]
        %v297 = vld [vmem:[%s267 + $0xb8] sm:$0xff]
        %v298 = vld [vmem:[%s267 + $0xc0] sm:$0xff]
        %v299 = vld [vmem:[%s267 + $0xc8] sm:$0xff]
        %v300 = vld [vmem:[%s267 + $0xd0] sm:$0xff]
        %v301 = vld [vmem:[%s267 + $0xd8] sm:$0xff]
        %v302 = vld [vmem:[%s267 + $0xe0] sm:$0xff]
        %v303 = vld [vmem:[%s267 + $0xe8] sm:$0xff]
        %v304 = vld [vmem:[%s267 + $0xf0] sm:$0xff]
        %v305 = vld [vmem:[%s267 + $0xf8] sm:$0xff]
        %v306 = vpack.c.bf16 %v275, %v274
        %v307 = vpack.c.bf16 %v277, %v276
        %v308 = vpack.c.bf16 %v279, %v278
        %v309 = vpack.c.bf16 %v281, %v280
        %v310 = vpack.c.bf16 %v283, %v282
        %v311 = vpack.c.bf16 %v285, %v284
        %v312 = vpack.c.bf16 %v287, %v286
        %v313 = vpack.c.bf16 %v289, %v288
        %v314 = vpack.c.bf16 %v291, %v290
        %v315 = vpack.c.bf16 %v293, %v292
        %v316 = vpack.c.bf16 %v295, %v294
        %v317 = vpack.c.bf16 %v297, %v296
        %v318 = vpack.c.bf16 %v299, %v298
        %v319 = vpack.c.bf16 %v301, %v300
        %v320 = vpack.c.bf16 %v303, %v302
        %v321 = vpack.c.bf16 %v305, %v304
        %v322 = vld [vmem:[%s1] sm:$0xf]
        %v323 = vld [vmem:[%s1 + $0x4] sm:$0xf]
        %v324 = vld [vmem:[%s1 + $0x8] sm:$0xf]
        %v325 = vld [vmem:[%s1 + $0xc] sm:$0xf]
        %v326 = vld [vmem:[%s1 + $0x10] sm:$0xf]
        %v327 = vld [vmem:[%s1 + $0x14] sm:$0xf]
        %v328 = vld [vmem:[%s1 + $0x18] sm:$0xf]
        %v329 = vld [vmem:[%s1 + $0x1c] sm:$0xf]
        %v330 = vld [vmem:[%s1 + $0x20] sm:$0xf]
        %v331 = vld [vmem:[%s1 + $0x24] sm:$0xf]
        %v332 = vld [vmem:[%s1 + $0x28] sm:$0xf]
        %v333 = vld [vmem:[%s1 + $0x2c] sm:$0xf]
        %v334 = vld [vmem:[%s1 + $0x30] sm:$0xf]
        %v335 = vld [vmem:[%s1 + $0x34] sm:$0xf]
        %v336 = vld [vmem:[%s1 + $0x38] sm:$0xf]
        %v337 = vld [vmem:[%s1 + $0x3c] sm:$0xf]
        %v338 = vld [vmem:[%s3] sm:$0xff]
        %v339 = vld [vmem:[%s3 + $0x8] sm:$0xff]
        %v340 = vld [vmem:[%s3 + $0x10] sm:$0xff]
        %v341 = vld [vmem:[%s3 + $0x18] sm:$0xff]
        %v342 = vld [vmem:[%s3 + $0x20] sm:$0xff]
        %v343 = vld [vmem:[%s3 + $0x28] sm:$0xff]
        %v344 = vld [vmem:[%s3 + $0x30] sm:$0xff]
        %v345 = vld [vmem:[%s3 + $0x38] sm:$0xff]
        %v346 = vld [vmem:[%s3 + $0x40] sm:$0xff]
        %v347 = vld [vmem:[%s3 + $0x48] sm:$0xff]
        %v348 = vld [vmem:[%s3 + $0x50] sm:$0xff]
        %v349 = vld [vmem:[%s3 + $0x58] sm:$0xff]
        %v350 = vld [vmem:[%s3 + $0x60] sm:$0xff]
        %v351 = vld [vmem:[%s3 + $0x68] sm:$0xff]
        %v352 = vld [vmem:[%s3 + $0x70] sm:$0xff]
        %v353 = vld [vmem:[%s3 + $0x78] sm:$0xff]
        %355 = vset.pattern.permute.xlu0 0
        %356 = vperm.xlu0 %355, %v338
        %v357 = vpop.permute.xlu0 %356
        %360 = vset.pattern.permute.xlu0 0
        %361 = vperm.xlu0 %360, %v339
        %v362 = vpop.permute.xlu0 %361
        %365 = vset.pattern.permute.xlu0 0
        %366 = vperm.xlu0 %365, %v340
        %v367 = vpop.permute.xlu0 %366
        %370 = vset.pattern.permute.xlu0 0
        %371 = vperm.xlu0 %370, %v341
        %v372 = vpop.permute.xlu0 %371
        %375 = vset.pattern.permute.xlu0 0
        %376 = vperm.xlu0 %375, %v342
        %v377 = vpop.permute.xlu0 %376
        %380 = vset.pattern.permute.xlu0 0
        %381 = vperm.xlu0 %380, %v343
        %v382 = vpop.permute.xlu0 %381
        %385 = vset.pattern.permute.xlu0 0
        %386 = vperm.xlu0 %385, %v344
        %v387 = vpop.permute.xlu0 %386
        %390 = vset.pattern.permute.xlu0 0
        %391 = vperm.xlu0 %390, %v345
        %v392 = vpop.permute.xlu0 %391
        %395 = vset.pattern.permute.xlu0 0
        %396 = vperm.xlu0 %395, %v346
        %v397 = vpop.permute.xlu0 %396
        %400 = vset.pattern.permute.xlu0 0
        %401 = vperm.xlu0 %400, %v347
        %v402 = vpop.permute.xlu0 %401
        %405 = vset.pattern.permute.xlu0 0
        %406 = vperm.xlu0 %405, %v348
        %v407 = vpop.permute.xlu0 %406
        %410 = vset.pattern.permute.xlu0 0
        %411 = vperm.xlu0 %410, %v349
        %v412 = vpop.permute.xlu0 %411
        %415 = vset.pattern.permute.xlu0 0
        %416 = vperm.xlu0 %415, %v350
        %v417 = vpop.permute.xlu0 %416
        %420 = vset.pattern.permute.xlu0 0
        %421 = vperm.xlu0 %420, %v351
        %v422 = vpop.permute.xlu0 %421
        %425 = vset.pattern.permute.xlu0 0
        %426 = vperm.xlu0 %425, %v352
        %v427 = vpop.permute.xlu0 %426
        %430 = vset.pattern.permute.xlu0 0
        %431 = vperm.xlu0 %430, %v353
        %v432 = vpop.permute.xlu0 %431
        %v450 = vunpack.c.l.b16 %v322
        %v451 = vunpack.c.l.b16 %v323
        %v452 = vunpack.c.l.b16 %v324
        %v453 = vunpack.c.l.b16 %v325
        %v454 = vunpack.c.l.b16 %v326
        %v455 = vunpack.c.l.b16 %v327
        %v456 = vunpack.c.l.b16 %v328
        %v457 = vunpack.c.l.b16 %v329
        %v458 = vunpack.c.l.b16 %v330
        %v459 = vunpack.c.l.b16 %v331
        %v460 = vunpack.c.l.b16 %v332
        %v461 = vunpack.c.l.b16 %v333
        %v462 = vunpack.c.l.b16 %v334
        %v463 = vunpack.c.l.b16 %v335
        %v464 = vunpack.c.l.b16 %v336
        %v465 = vunpack.c.l.b16 %v337
        %v466 = vpack.c.b16 %v451, %v450
        %v467 = vpack.c.b16 %v453, %v452
        %v468 = vpack.c.b16 %v455, %v454
        %v469 = vpack.c.b16 %v457, %v456
        %v470 = vpack.c.b16 %v459, %v458
        %v471 = vpack.c.b16 %v461, %v460
        %v472 = vpack.c.b16 %v463, %v462
        %v473 = vpack.c.b16 %v465, %v464
        %vm474 = vcmask 564224
        %v476 = vsel %vm474, %v466, 0
        %v479 = vsel %vm474, %v467, 0
        %v482 = vsel %vm474, %v468, 0
        %v485 = vsel %vm474, %v469, 0
        %v488 = vsel %vm474, %v470, 0
        %v491 = vsel %vm474, %v471, 0
        %v494 = vsel %vm474, %v472, 0
        %v497 = vsel %vm474, %v473, 0
        %v500 = vsel %vm474, %v306, 0
        %v503 = vsel %vm474, %v307, 0
        %v506 = vsel %vm474, %v308, 0
        %v509 = vsel %vm474, %v309, 0
        %v512 = vsel %vm474, %v310, 0
        %v515 = vsel %vm474, %v311, 0
        %v518 = vsel %vm474, %v312, 0
        %v521 = vsel %vm474, %v313, 0
        %v524 = vsel %vm474, %v314, 0
        %v527 = vsel %vm474, %v315, 0
        %v530 = vsel %vm474, %v316, 0
        %v533 = vsel %vm474, %v317, 0
        %v536 = vsel %vm474, %v318, 0
        %v539 = vsel %vm474, %v319, 0
        %v542 = vsel %vm474, %v320, 0
        %v545 = vsel %vm474, %v321, 0
        %547 = vmatpush.bf16.xpose.msra.mxu0 %v521
        %548 = vmatpush.bf16.xpose.msra.mxu0 %v518
        %549 = vmatpush.bf16.xpose.msra.mxu0 %v515
        %550 = vmatpush.bf16.xpose.msra.mxu0 %v512
        %551 = vmatpush.bf16.xpose.msra.mxu0 %v509
        %552 = vmatpush.bf16.xpose.msra.mxu0 %v506
        %553 = vmatpush.bf16.xpose.msra.mxu0 %v503
        %554 = vmatpush.bf16.xpose.msra.mxu0 %v500
        %555 = vmatmul.bf16.gmra.mxu0 %v476
        %v556 = vpop.f32.mrf.mxu0
        %v557 = vadd.f32 %v357, %v556
        %v558 = vpop.f32.mrf.mxu0
        %v559 = vadd.f32 %v362, %v558
        %560 = vmatmul.bf16.gmra.mxu0 %v479
        %v561 = vpop.f32.mrf.mxu0
        %v562 = vadd.f32 %v367, %v561
        %v563 = vpop.f32.mrf.mxu0
        %v564 = vadd.f32 %v372, %v563
        %565 = vmatmul.bf16.gmra.mxu0 %v482
        %v566 = vpop.f32.mrf.mxu0
        %v567 = vadd.f32 %v377, %v566
        %v568 = vpop.f32.mrf.mxu0
        %v569 = vadd.f32 %v382, %v568
        %570 = vmatmul.bf16.gmra.mxu0 %v485
        %v571 = vpop.f32.mrf.mxu0
        %v572 = vadd.f32 %v387, %v571
        %v573 = vpop.f32.mrf.mxu0
        %v574 = vadd.f32 %v392, %v573
        %575 = vmatmul.bf16.gmra.mxu0 %v488
        %v576 = vpop.f32.mrf.mxu0
        %v577 = vadd.f32 %v397, %v576
        %v578 = vpop.f32.mrf.mxu0
        %v579 = vadd.f32 %v402, %v578
        %580 = vmatmul.bf16.gmra.mxu0 %v491
        %v581 = vpop.f32.mrf.mxu0
        %v582 = vadd.f32 %v407, %v581
        %v583 = vpop.f32.mrf.mxu0
        %v584 = vadd.f32 %v412, %v583
        %585 = vmatmul.bf16.gmra.mxu0 %v494
        %v586 = vpop.f32.mrf.mxu0
        %v587 = vadd.f32 %v417, %v586
        %v588 = vpop.f32.mrf.mxu0
        %v589 = vadd.f32 %v422, %v588
        %590 = vmatmul.bf16.gmra.mxu0 %v497
        %v591 = vpop.f32.mrf.mxu0
        %v592 = vadd.f32 %v427, %v591
        %v593 = vpop.f32.mrf.mxu0
        %v594 = vadd.f32 %v432, %v593
        %595 = vdwg.mxu0
        %596 = vmatpush.bf16.xpose.msra.mxu0 %v545
        %597 = vmatpush.bf16.xpose.msra.mxu0 %v542
        %598 = vmatpush.bf16.xpose.msra.mxu0 %v539
        %599 = vmatpush.bf16.xpose.msra.mxu0 %v536
        %600 = vmatpush.bf16.xpose.msra.mxu0 %v533
        %601 = vmatpush.bf16.xpose.msra.mxu0 %v530
        %602 = vmatpush.bf16.xpose.msra.mxu0 %v527
        %603 = vmatpush.bf16.xpose.msra.mxu0 %v524
        %604 = vmatmul.bf16.gmra.mxu0 %v476
        %v605 = vpop.f32.mrf.mxu0
        %v606 = vadd.f32 %v357, %v605
        %v607 = vpop.f32.mrf.mxu0
        %v608 = vadd.f32 %v362, %v607
        %609 = vmatmul.bf16.gmra.mxu0 %v479
        %v610 = vpop.f32.mrf.mxu0
        %v611 = vadd.f32 %v367, %v610
        %v612 = vpop.f32.mrf.mxu0
        %v613 = vadd.f32 %v372, %v612
        %614 = vmatmul.bf16.gmra.mxu0 %v482
        %v615 = vpop.f32.mrf.mxu0
        %v616 = vadd.f32 %v377, %v615
        %v617 = vpop.f32.mrf.mxu0
        %v618 = vadd.f32 %v382, %v617
        %619 = vmatmul.bf16.gmra.mxu0 %v485
        %v620 = vpop.f32.mrf.mxu0
        %v621 = vadd.f32 %v387, %v620
        %v622 = vpop.f32.mrf.mxu0
        %v623 = vadd.f32 %v392, %v622
        %624 = vmatmul.bf16.gmra.mxu0 %v488
        %v625 = vpop.f32.mrf.mxu0
        %v626 = vadd.f32 %v397, %v625
        %v627 = vpop.f32.mrf.mxu0
        %v628 = vadd.f32 %v402, %v627
        %629 = vmatmul.bf16.gmra.mxu0 %v491
        %v630 = vpop.f32.mrf.mxu0
        %v631 = vadd.f32 %v407, %v630
        %v632 = vpop.f32.mrf.mxu0
        %v633 = vadd.f32 %v412, %v632
        %634 = vmatmul.bf16.gmra.mxu0 %v494
        %v635 = vpop.f32.mrf.mxu0
        %v636 = vadd.f32 %v417, %v635
        %v637 = vpop.f32.mrf.mxu0
        %v638 = vadd.f32 %v422, %v637
        %639 = vmatmul.bf16.gmra.mxu0 %v497
        %v640 = vpop.f32.mrf.mxu0
        %v641 = vadd.f32 %v427, %v640
        %v642 = vpop.f32.mrf.mxu0
        %v643 = vadd.f32 %v432, %v642
        %644 = vdwg.mxu0
        %v645 = vpack.c.bf16 %v559, %v557
        %v646 = vpack.c.bf16 %v608, %v606
        %v647 = vpack.c.bf16 %v564, %v562
        %v648 = vpack.c.bf16 %v613, %v611
        %v649 = vpack.c.bf16 %v569, %v567
        %v650 = vpack.c.bf16 %v618, %v616
        %v651 = vpack.c.bf16 %v574, %v572
        %v652 = vpack.c.bf16 %v623, %v621
        %v653 = vpack.c.bf16 %v579, %v577
        %v654 = vpack.c.bf16 %v628, %v626
        %v655 = vpack.c.bf16 %v584, %v582
        %v656 = vpack.c.bf16 %v633, %v631
        %v657 = vpack.c.bf16 %v589, %v587
        %v658 = vpack.c.bf16 %v638, %v636
        %v659 = vpack.c.bf16 %v594, %v592
        %v660 = vpack.c.bf16 %v643, %v641
        %v661 = vunpack.c.l.bf16 %v645
        %v662 = vunpack.c.l.bf16 %v646
        %v663 = vunpack.c.h.bf16 %v645
        %v664 = vunpack.c.h.bf16 %v646
        %v665 = vunpack.c.l.bf16 %v647
        %v666 = vunpack.c.l.bf16 %v648
        %v667 = vunpack.c.h.bf16 %v647
        %v668 = vunpack.c.h.bf16 %v648
        %v669 = vunpack.c.l.bf16 %v649
        %v670 = vunpack.c.l.bf16 %v650
        %v671 = vunpack.c.h.bf16 %v649
        %v672 = vunpack.c.h.bf16 %v650
        %v673 = vunpack.c.l.bf16 %v651
        %v674 = vunpack.c.l.bf16 %v652
        %v675 = vunpack.c.h.bf16 %v651
        %v676 = vunpack.c.h.bf16 %v652
        %v677 = vunpack.c.l.bf16 %v653
        %v678 = vunpack.c.l.bf16 %v654
        %v679 = vunpack.c.h.bf16 %v653
        %v680 = vunpack.c.h.bf16 %v654
        %v681 = vunpack.c.l.bf16 %v655
        %v682 = vunpack.c.l.bf16 %v656
        %v683 = vunpack.c.h.bf16 %v655
        %v684 = vunpack.c.h.bf16 %v656
        %v685 = vunpack.c.l.bf16 %v657
        %v686 = vunpack.c.l.bf16 %v658
        %v687 = vunpack.c.h.bf16 %v657
        %v688 = vunpack.c.h.bf16 %v658
        %v689 = vunpack.c.l.bf16 %v659
        %v690 = vunpack.c.l.bf16 %v660
        %v691 = vunpack.c.h.bf16 %v659
        %v692 = vunpack.c.h.bf16 %v660
        %v693 = vtanh.pop %v661
        %v694 = vtanh.pop %v662
        %v695 = vtanh.pop %v663
        %v696 = vtanh.pop %v664
        %v697 = vtanh.pop %v665
        %v698 = vtanh.pop %v666
        %v699 = vtanh.pop %v667
        %v700 = vtanh.pop %v668
        %v701 = vtanh.pop %v669
        %v702 = vtanh.pop %v670
        %v703 = vtanh.pop %v671
        %v704 = vtanh.pop %v672
        %v705 = vtanh.pop %v673
        %v706 = vtanh.pop %v674
        %v707 = vtanh.pop %v675
        %v708 = vtanh.pop %v676
        %v709 = vtanh.pop %v677
        %v710 = vtanh.pop %v678
        %v711 = vtanh.pop %v679
        %v712 = vtanh.pop %v680
        %v713 = vtanh.pop %v681
        %v714 = vtanh.pop %v682
        %v715 = vtanh.pop %v683
        %v716 = vtanh.pop %v684
        %v717 = vtanh.pop %v685
        %v718 = vtanh.pop %v686
        %v719 = vtanh.pop %v687
        %v720 = vtanh.pop %v688
        %v721 = vtanh.pop %v689
        %v722 = vtanh.pop %v690
        %v723 = vtanh.pop %v691
        %v724 = vtanh.pop %v692
        %v725 = vpack.c.bf16 %v695, %v693
        %v726 = vpack.c.bf16 %v696, %v694
        %v727 = vpack.c.bf16 %v699, %v697
        %v728 = vpack.c.bf16 %v700, %v698
        %v729 = vpack.c.bf16 %v703, %v701
        %v730 = vpack.c.bf16 %v704, %v702
        %v731 = vpack.c.bf16 %v707, %v705
        %v732 = vpack.c.bf16 %v708, %v706
        %v733 = vpack.c.bf16 %v711, %v709
        %v734 = vpack.c.bf16 %v712, %v710
        %v735 = vpack.c.bf16 %v715, %v713
        %v736 = vpack.c.bf16 %v716, %v714
        %v737 = vpack.c.bf16 %v719, %v717
        %v738 = vpack.c.bf16 %v720, %v718
        %v739 = vpack.c.bf16 %v723, %v721
        %v740 = vpack.c.bf16 %v724, %v722
        %v741 = vld [vmem:[%s2] sm:$0xf]
        %v742 = vld [vmem:[%s2 + $0x4] sm:$0xf]
        %v743 = vld [vmem:[%s2 + $0x8] sm:$0xf]
        %v744 = vld [vmem:[%s2 + $0xc] sm:$0xf]
        %v745 = vld [vmem:[%s2 + $0x10] sm:$0xf]
        %v746 = vld [vmem:[%s2 + $0x14] sm:$0xf]
        %v747 = vld [vmem:[%s2 + $0x18] sm:$0xf]
        %v748 = vld [vmem:[%s2 + $0x1c] sm:$0xf]
        %v749 = vld [vmem:[%s2 + $0x20] sm:$0xf]
        %v750 = vld [vmem:[%s2 + $0x24] sm:$0xf]
        %v751 = vld [vmem:[%s2 + $0x28] sm:$0xf]
        %v752 = vld [vmem:[%s2 + $0x2c] sm:$0xf]
        %v753 = vld [vmem:[%s2 + $0x30] sm:$0xf]
        %v754 = vld [vmem:[%s2 + $0x34] sm:$0xf]
        %v755 = vld [vmem:[%s2 + $0x38] sm:$0xf]
        %v756 = vld [vmem:[%s2 + $0x3c] sm:$0xf]
        %757 = vset.pattern.permute.xlu0 1
        %758 = vperm.xlu0 %757, %v338
        %v759 = vpop.permute.xlu0 %758
        %761 = vset.pattern.permute.xlu0 1
        %762 = vperm.xlu0 %761, %v339
        %v763 = vpop.permute.xlu0 %762
        %765 = vset.pattern.permute.xlu0 1
        %766 = vperm.xlu0 %765, %v340
        %v767 = vpop.permute.xlu0 %766
        %769 = vset.pattern.permute.xlu0 1
        %770 = vperm.xlu0 %769, %v341
        %v771 = vpop.permute.xlu0 %770
        %773 = vset.pattern.permute.xlu0 1
        %774 = vperm.xlu0 %773, %v342
        %v775 = vpop.permute.xlu0 %774
        %777 = vset.pattern.permute.xlu0 1
        %778 = vperm.xlu0 %777, %v343
        %v779 = vpop.permute.xlu0 %778
        %781 = vset.pattern.permute.xlu0 1
        %782 = vperm.xlu0 %781, %v344
        %v783 = vpop.permute.xlu0 %782
        %785 = vset.pattern.permute.xlu0 1
        %786 = vperm.xlu0 %785, %v345
        %v787 = vpop.permute.xlu0 %786
        %789 = vset.pattern.permute.xlu0 1
        %790 = vperm.xlu0 %789, %v346
        %v791 = vpop.permute.xlu0 %790
        %793 = vset.pattern.permute.xlu0 1
        %794 = vperm.xlu0 %793, %v347
        %v795 = vpop.permute.xlu0 %794
        %797 = vset.pattern.permute.xlu0 1
        %798 = vperm.xlu0 %797, %v348
        %v799 = vpop.permute.xlu0 %798
        %801 = vset.pattern.permute.xlu0 1
        %802 = vperm.xlu0 %801, %v349
        %v803 = vpop.permute.xlu0 %802
        %805 = vset.pattern.permute.xlu0 1
        %806 = vperm.xlu0 %805, %v350
        %v807 = vpop.permute.xlu0 %806
        %809 = vset.pattern.permute.xlu0 1
        %810 = vperm.xlu0 %809, %v351
        %v811 = vpop.permute.xlu0 %810
        %813 = vset.pattern.permute.xlu0 1
        %814 = vperm.xlu0 %813, %v352
        %v815 = vpop.permute.xlu0 %814
        %817 = vset.pattern.permute.xlu0 1
        %818 = vperm.xlu0 %817, %v353
        %v819 = vpop.permute.xlu0 %818
        %v837 = vunpack.c.l.b16 %v741
        %v838 = vunpack.c.l.b16 %v742
        %v839 = vunpack.c.l.b16 %v743
        %v840 = vunpack.c.l.b16 %v744
        %v841 = vunpack.c.l.b16 %v745
        %v842 = vunpack.c.l.b16 %v746
        %v843 = vunpack.c.l.b16 %v747
        %v844 = vunpack.c.l.b16 %v748
        %v845 = vunpack.c.l.b16 %v749
        %v846 = vunpack.c.l.b16 %v750
        %v847 = vunpack.c.l.b16 %v751
        %v848 = vunpack.c.l.b16 %v752
        %v849 = vunpack.c.l.b16 %v753
        %v850 = vunpack.c.l.b16 %v754
        %v851 = vunpack.c.l.b16 %v755
        %v852 = vunpack.c.l.b16 %v756
        %v853 = vpack.c.b16 %v838, %v837
        %v854 = vpack.c.b16 %v840, %v839
        %v855 = vpack.c.b16 %v842, %v841
        %v856 = vpack.c.b16 %v844, %v843
        %v857 = vpack.c.b16 %v846, %v845
        %v858 = vpack.c.b16 %v848, %v847
        %v859 = vpack.c.b16 %v850, %v849
        %v860 = vpack.c.b16 %v852, %v851
        %869 = vmatpush.bf16.msra.mxu0 %v739
        %870 = vmatpush.bf16.msra.mxu0 %v737
        %871 = vmatpush.bf16.msra.mxu0 %v735
        %872 = vmatpush.bf16.msra.mxu0 %v733
        %873 = vmatpush.bf16.msra.mxu0 %v731
        %874 = vmatpush.bf16.msra.mxu0 %v729
        %875 = vmatpush.bf16.msra.mxu0 %v727
        %876 = vmatpush.bf16.msra.mxu0 %v725
        %877 = vmatmul.bf16.gmra.mxu0 %v853
        %v878 = vpop.f32.mrf.mxu0
        %v879 = vadd.f32 %v759, %v878
        %v880 = vpop.f32.mrf.mxu0
        %v881 = vadd.f32 %v763, %v880
        %882 = vmatmul.bf16.gmra.mxu0 %v854
        %v883 = vpop.f32.mrf.mxu0
        %v884 = vadd.f32 %v767, %v883
        %v885 = vpop.f32.mrf.mxu0
        %v886 = vadd.f32 %v771, %v885
        %887 = vmatmul.bf16.gmra.mxu0 %v855
        %v888 = vpop.f32.mrf.mxu0
        %v889 = vadd.f32 %v775, %v888
        %v890 = vpop.f32.mrf.mxu0
        %v891 = vadd.f32 %v779, %v890
        %892 = vmatmul.bf16.gmra.mxu0 %v856
        %v893 = vpop.f32.mrf.mxu0
        %v894 = vadd.f32 %v783, %v893
        %v895 = vpop.f32.mrf.mxu0
        %v896 = vadd.f32 %v787, %v895
        %897 = vmatmul.bf16.gmra.mxu0 %v857
        %v898 = vpop.f32.mrf.mxu0
        %v899 = vadd.f32 %v791, %v898
        %v900 = vpop.f32.mrf.mxu0
        %v901 = vadd.f32 %v795, %v900
        %902 = vmatmul.bf16.gmra.mxu0 %v858
        %v903 = vpop.f32.mrf.mxu0
        %v904 = vadd.f32 %v799, %v903
        %v905 = vpop.f32.mrf.mxu0
        %v906 = vadd.f32 %v803, %v905
        %907 = vmatmul.bf16.gmra.mxu0 %v859
        %v908 = vpop.f32.mrf.mxu0
        %v909 = vadd.f32 %v807, %v908
        %v910 = vpop.f32.mrf.mxu0
        %v911 = vadd.f32 %v811, %v910
        %912 = vmatmul.bf16.gmra.mxu0 %v860
        %v913 = vpop.f32.mrf.mxu0
        %v914 = vadd.f32 %v815, %v913
        %v915 = vpop.f32.mrf.mxu0
        %v916 = vadd.f32 %v819, %v915
        %917 = vdwg.mxu0
        %918 = vmatpush.bf16.msra.mxu0 %v740
        %919 = vmatpush.bf16.msra.mxu0 %v738
        %920 = vmatpush.bf16.msra.mxu0 %v736
        %921 = vmatpush.bf16.msra.mxu0 %v734
        %922 = vmatpush.bf16.msra.mxu0 %v732
        %923 = vmatpush.bf16.msra.mxu0 %v730
        %924 = vmatpush.bf16.msra.mxu0 %v728
        %925 = vmatpush.bf16.msra.mxu0 %v726
        %926 = vmatmul.bf16.gmra.mxu0 %v853
        %v927 = vpop.f32.mrf.mxu0
        %v928 = vadd.f32 %v759, %v927
        %v929 = vpop.f32.mrf.mxu0
        %v930 = vadd.f32 %v763, %v929
        %931 = vmatmul.bf16.gmra.mxu0 %v854
        %v932 = vpop.f32.mrf.mxu0
        %v933 = vadd.f32 %v767, %v932
        %v934 = vpop.f32.mrf.mxu0
        %v935 = vadd.f32 %v771, %v934
        %936 = vmatmul.bf16.gmra.mxu0 %v855
        %v937 = vpop.f32.mrf.mxu0
        %v938 = vadd.f32 %v775, %v937
        %v939 = vpop.f32.mrf.mxu0
        %v940 = vadd.f32 %v779, %v939
        %941 = vmatmul.bf16.gmra.mxu0 %v856
        %v942 = vpop.f32.mrf.mxu0
        %v943 = vadd.f32 %v783, %v942
        %v944 = vpop.f32.mrf.mxu0
        %v945 = vadd.f32 %v787, %v944
        %946 = vmatmul.bf16.gmra.mxu0 %v857
        %v947 = vpop.f32.mrf.mxu0
        %v948 = vadd.f32 %v791, %v947
        %v949 = vpop.f32.mrf.mxu0
        %v950 = vadd.f32 %v795, %v949
        %951 = vmatmul.bf16.gmra.mxu0 %v858
        %v952 = vpop.f32.mrf.mxu0
        %v953 = vadd.f32 %v799, %v952
        %v954 = vpop.f32.mrf.mxu0
        %v955 = vadd.f32 %v803, %v954
        %956 = vmatmul.bf16.gmra.mxu0 %v859
        %v957 = vpop.f32.mrf.mxu0
        %v958 = vadd.f32 %v807, %v957
        %v959 = vpop.f32.mrf.mxu0
        %v960 = vadd.f32 %v811, %v959
        %961 = vmatmul.bf16.gmra.mxu0 %v860
        %v962 = vpop.f32.mrf.mxu0
        %v963 = vadd.f32 %v815, %v962
        %v964 = vpop.f32.mrf.mxu0
        %v965 = vadd.f32 %v819, %v964
        %966 = vdwg.mxu0
        %v967 = vpack.c.bf16 %v881, %v879
        %v968 = vpack.c.bf16 %v930, %v928
        %v969 = vpack.c.bf16 %v886, %v884
        %v970 = vpack.c.bf16 %v935, %v933
        %v971 = vpack.c.bf16 %v891, %v889
        %v972 = vpack.c.bf16 %v940, %v938
        %v973 = vpack.c.bf16 %v896, %v894
        %v974 = vpack.c.bf16 %v945, %v943
        %v975 = vpack.c.bf16 %v901, %v899
        %v976 = vpack.c.bf16 %v950, %v948
        %v977 = vpack.c.bf16 %v906, %v904
        %v978 = vpack.c.bf16 %v955, %v953
        %v979 = vpack.c.bf16 %v911, %v909
        %v980 = vpack.c.bf16 %v960, %v958
        %v981 = vpack.c.bf16 %v916, %v914
        %v982 = vpack.c.bf16 %v965, %v963
        %v983 = vunpack.c.l.bf16 %v967
        %v984 = vunpack.c.l.bf16 %v968
        %v985 = vunpack.c.h.bf16 %v967
        %v986 = vunpack.c.h.bf16 %v968
        %v987 = vunpack.c.l.bf16 %v969
        %v988 = vunpack.c.l.bf16 %v970
        %v989 = vunpack.c.h.bf16 %v969
        %v990 = vunpack.c.h.bf16 %v970
        %v991 = vunpack.c.l.bf16 %v971
        %v992 = vunpack.c.l.bf16 %v972
        %v993 = vunpack.c.h.bf16 %v971
        %v994 = vunpack.c.h.bf16 %v972
        %v995 = vunpack.c.l.bf16 %v973
        %v996 = vunpack.c.l.bf16 %v974
        %v997 = vunpack.c.h.bf16 %v973
        %v998 = vunpack.c.h.bf16 %v974
        %v999 = vunpack.c.l.bf16 %v975
        %v1000 = vunpack.c.l.bf16 %v976
        %v1001 = vunpack.c.h.bf16 %v975
        %v1002 = vunpack.c.h.bf16 %v976
        %v1003 = vunpack.c.l.bf16 %v977
        %v1004 = vunpack.c.l.bf16 %v978
        %v1005 = vunpack.c.h.bf16 %v977
        %v1006 = vunpack.c.h.bf16 %v978
        %v1007 = vunpack.c.l.bf16 %v979
        %v1008 = vunpack.c.l.bf16 %v980
        %v1009 = vunpack.c.h.bf16 %v979
        %v1010 = vunpack.c.h.bf16 %v980
        %v1011 = vunpack.c.l.bf16 %v981
        %v1012 = vunpack.c.l.bf16 %v982
        %v1013 = vunpack.c.h.bf16 %v981
        %v1014 = vunpack.c.h.bf16 %v982
        %v1015 = vtanh.pop %v983
        %v1016 = vtanh.pop %v984
        %v1017 = vtanh.pop %v985
        %v1018 = vtanh.pop %v986
        %v1019 = vtanh.pop %v987
        %v1020 = vtanh.pop %v988
        %v1021 = vtanh.pop %v989
        %v1022 = vtanh.pop %v990
        %v1023 = vtanh.pop %v991
        %v1024 = vtanh.pop %v992
        %v1025 = vtanh.pop %v993
        %v1026 = vtanh.pop %v994
        %v1027 = vtanh.pop %v995
        %v1028 = vtanh.pop %v996
        %v1029 = vtanh.pop %v997
        %v1030 = vtanh.pop %v998
        %v1031 = vtanh.pop %v999
        %v1032 = vtanh.pop %v1000
        %v1033 = vtanh.pop %v1001
        %v1034 = vtanh.pop %v1002
        %v1035 = vtanh.pop %v1003
        %v1036 = vtanh.pop %v1004
        %v1037 = vtanh.pop %v1005
        %v1038 = vtanh.pop %v1006
        %v1039 = vtanh.pop %v1007
        %v1040 = vtanh.pop %v1008
        %v1041 = vtanh.pop %v1009
        %v1042 = vtanh.pop %v1010
        %v1043 = vtanh.pop %v1011
        %v1044 = vtanh.pop %v1012
        %v1045 = vtanh.pop %v1013
        %v1046 = vtanh.pop %v1014
        %v1047 = vpack.c.bf16 %v1017, %v1015
        %v1048 = vpack.c.bf16 %v1018, %v1016
        %v1049 = vpack.c.bf16 %v1021, %v1019
        %v1050 = vpack.c.bf16 %v1022, %v1020
        %v1051 = vpack.c.bf16 %v1025, %v1023
        %v1052 = vpack.c.bf16 %v1026, %v1024
        %v1053 = vpack.c.bf16 %v1029, %v1027
        %v1054 = vpack.c.bf16 %v1030, %v1028
        %v1055 = vpack.c.bf16 %v1033, %v1031
        %v1056 = vpack.c.bf16 %v1034, %v1032
        %v1057 = vpack.c.bf16 %v1037, %v1035
        %v1058 = vpack.c.bf16 %v1038, %v1036
        %v1059 = vpack.c.bf16 %v1041, %v1039
        %v1060 = vpack.c.bf16 %v1042, %v1040
        %v1061 = vpack.c.bf16 %v1045, %v1043
        %v1062 = vpack.c.bf16 %v1046, %v1044
        %v1063 = vld [vmem:[%s4] sm:$0xf]
        %1064 = vmatpush.bf16.msra.mxu0 %v1061
        %1065 = vmatpush.bf16.msra.mxu0 %v1059
        %1066 = vmatpush.bf16.msra.mxu0 %v1057
        %1067 = vmatpush.bf16.msra.mxu0 %v1055
        %1068 = vmatpush.bf16.msra.mxu0 %v1053
        %1069 = vmatpush.bf16.msra.mxu0 %v1051
        %1070 = vmatpush.bf16.msra.mxu0 %v1049
        %1071 = vmatpush.bf16.msra.mxu0 %v1047
        %1072 = vmatmul.bf16.gmra.mxu0 %v1063
        %v1073 = vpop.f32.mrf.mxu0
        %v1074 = vadd.f32 0.0, %v1073
        %v1075 = vpop.f32.mrf.mxu0
        %1076 = vdwg.mxu0
        %1077 = vmatpush.bf16.msra.mxu0 %v1062
        %1078 = vmatpush.bf16.msra.mxu0 %v1060
        %1079 = vmatpush.bf16.msra.mxu0 %v1058
        %1080 = vmatpush.bf16.msra.mxu0 %v1056
        %1081 = vmatpush.bf16.msra.mxu0 %v1054
        %1082 = vmatpush.bf16.msra.mxu0 %v1052
        %1083 = vmatpush.bf16.msra.mxu0 %v1050
        %1084 = vmatpush.bf16.msra.mxu0 %v1048
        %1085 = vmatmul.bf16.gmra.mxu0 %v1063
        %v1086 = vpop.f32.mrf.mxu0
        %v1087 = vadd.f32 0.0, %v1086
        %v1088 = vpop.f32.mrf.mxu0
        %1089 = vdwg.mxu0
        %s1090 = sld [smem:[#allocation2]]
        %v1091 = vstv %s1090
        %v1092 = vadd.f32 %v1074, %v1091
        %v1093 = vadd.f32 %v1087, %v1091
        %v1094 = vxor.u32 %v1092, 2147483648
        %v1095 = vxor.u32 %v1093, 2147483648
        %v1096 = vmul.f32 %v1094, 1.442695
        %v1097 = vpow.pop %v1096
        %v1098 = vmul.f32 %v1095, 1.442695
        %v1099 = vpow.pop %v1098
        %v1100 = vadd.f32 %v1097, 1.0
        %v1101 = vadd.f32 %v1099, 1.0
        %v1102 = vrcp.pop %v1100
        %v1103 = vmul.f32 %v1100, %v1102
        %v1104 = vsub.f32 1.0, %v1103
        %v1105 = vmul.f32 %v1102, %v1104
        %v1106 = vadd.f32 %v1102, %v1105
        %vm1107 = vweird.f32 %v1100
        %vm1108 = vweird.f32 %v1102
        %vm1109 = vmor %vm1107, %vm1108
        %v1110 = vsel %vm1109, %v1102, %v1106
        %v1111 = vand.u32 2147483647, %v1100
        %vm1112 = vcmp.eq.f32.partialorder %v1111, 8.507059e+37
        %v1113 = vand.u32 %v1100, 2147483648
        %v1114 = vor.u32 1.1754944e-38, %v1113
        %v1115 = vsel %vm1112, %v1114, %v1110
        %v1116 = vmul.f32 1.0, %v1115
        %v1117 = vrcp.pop %v1101
        %v1118 = vmul.f32 %v1101, %v1117
        %v1119 = vsub.f32 1.0, %v1118
        %v1120 = vmul.f32 %v1117, %v1119
        %v1121 = vadd.f32 %v1117, %v1120
        %vm1122 = vweird.f32 %v1101
        %vm1123 = vweird.f32 %v1117
        %vm1124 = vmor %vm1122, %vm1123
        %v1125 = vsel %vm1124, %v1117, %v1121
        %v1126 = vand.u32 2147483647, %v1101
        %vm1127 = vcmp.eq.f32.partialorder %v1126, 8.507059e+37
        %v1128 = vand.u32 %v1101, 2147483648
        %v1129 = vor.u32 1.1754944e-38, %v1128
        %v1130 = vsel %vm1127, %v1129, %v1125
        %v1131 = vmul.f32 1.0, %v1130
        %v1134 = vrot.slane %v1131, 7
        %vm1135 = vcmask 1040384
        %v1136 = vsel %vm1135, %v1116, %v1134
        %v1138 = vlaneseq
        %vm1139 = vcmp.ge.s32.totalorder %v1138, 0
        %vm1140 = vcmp.lt.s32.totalorder %v1138, 256
        %vm1141 = vmand %vm1139, %vm1140
        %1142 = vst.msk [vmem:[%s258] sm:$0x3] %vm1141, %v1136
        %s1143 = sand.u32 %s160, 1
        %s1144 = scalar_lea.sflag [#allocation4], %s1143
        %s1145 = sand.u32 %s160, 1
        %s1146 = smul.addr %s1145, 2
        %s1147 = scalar_lea.vmem [#allocation3], %s1146
        // Predicated region
        $region45: #{tpu_custom_call.1} parent=43 // pred_check
          %p1148 = pneg %p170
        $region46: #{tpu_custom_call.1} parent=43 // pred_check_branch
          %1150 = sbr.rel (%p1148) target = $region48
        $region47: #{tpu_custom_call.1} parent=43 // pred_region
          %s1151 = smul.u32 2, %s21
          %1153 = vsyncadd %s1144, 0
          %s1154 = scalar_lea.hbm %s6, %s1151
          %s1156 = sshll.u32 %s1147, 4
          %s1157 = int_to_ptr.vmem [resolvable:$true] %s1156
          %s1158 = sshll.u32 %s1154, 4
          %s1159 = int_to_ptr.hbm [resolvable:$true] %s1158
          %1161 = dma.vmem_to_hbm [thread:$0]  %s1157, 32, %s1159, %s1144
        $region48: #{tpu_custom_call.1} parent=43 // pred_fallthru
          _
      $region44: #{tpu_custom_call.1} parent=5 // pred_fallthru
        _
      %p1162 = scmp.le.s32.totalorder 2, %s16
      // Predicated region
      $region49: #{tpu_custom_call.1} parent=5 // pred_check
        %p1163 = pneg %p1162
      $region50: #{tpu_custom_call.1} parent=5 // pred_check_branch
        %1165 = sbr.rel (%p1163) target = $region52
      $region51: #{tpu_custom_call.1} parent=5 // pred_region
        %s1166 = ssub.s32 %s16, 2
        // Predicated region
        $region53: #{tpu_custom_call.1} parent=51 // pred_check
          %p1167 = pneg %p176
        $region54: #{tpu_custom_call.1} parent=51 // pred_check_branch
          %1169 = sbr.rel (%p1167) target = $region56
        $region55: #{tpu_custom_call.1} parent=51 // pred_region
          %s1170 = sand.u32 %s161, 1
          %s1171 = scalar_lea.sflag [#allocation4], %s1170
          %s1172 = sand.u32 %s161, 1
          %s1173 = smul.addr %s1172, 2
          %s1174 = scalar_lea.vmem [#allocation3], %s1173
          %1176 = dma.done %s1171, 32
        $region56: #{tpu_custom_call.1} parent=51 // pred_fallthru
          _
      $region52: #{tpu_custom_call.1} parent=5 // pred_fallthru
        _
    $region6: #{tpu_custom_call.1} parent=1 // loop_footer
      %s20 = sadd.s32 1, %s16
    $region7: #{tpu_custom_call.1} parent=1 // loop_footer_branch
      %15 = sbr.rel target = $region3
    $region8: #{tpu_custom_call.1} parent=1 // loop_exit
      _
    %1177 = vsyncpa [#allocation4], 1
    %s1178 = scalar_lea.sflag [#allocation4], 1
    %1179 = vsyncpa %s1178, 1

</llo_original>
